<compile_context>
chip_gen: v7x
topology: tpu7x:2x2x1
jax: 0.10.0
libtpu: 0.0.40
codegen_flags: <defaults>
</compile_context>

<pallas_src>
import functools

import jax
import jax.numpy as jnp
from jax.experimental import pallas as pl
from jax.experimental.pallas import tpu as pltpu


def _round_up(n, m):
    return ((n + m - 1) // m) * m


def _mlp_kernel(x_ref, w1_ref, b1_ref, w2_ref, b2_ref, w3_ref, b3_ref, o_ref):
    """Whole 3-layer MLP on one batch tile in VMEM.

    x / W operands are bf16, accumulation is fp32 on the MXU, biases fp32.
    """
    x = x_ref[...]                                                   # (TB, 784) bf16
    h1 = jnp.dot(x, w1_ref[...], preferred_element_type=jnp.float32)
    h1 = jnp.maximum(h1 + b1_ref[...], 0.0).astype(jnp.bfloat16)     # (TB, 128) bf16
    h2 = jnp.dot(h1, w2_ref[...], preferred_element_type=jnp.float32)
    h2 = jnp.maximum(h2 + b2_ref[...], 0.0).astype(jnp.bfloat16)     # (TB, 64) bf16
    o = jnp.dot(h2, w3_ref[...], preferred_element_type=jnp.float32)
    o_ref[...] = (o + b3_ref[...]).astype(o_ref.dtype)               # (TB, 128) lane-dense


def _choose_batch_tile(B, batch_tile):
    tb = min(batch_tile, _round_up(B, 8))
    # v7x has 2 TensorCores sharing the "parallel" grid axis: keep >= 2 grid
    # steps whenever the batch permits so neither core idles.
    if B >= 16:
        tb = min(tb, _round_up(pl.cdiv(B, 2), 8))
    return max(8, _round_up(tb, 8))


@functools.partial(jax.jit, static_argnames=("batch_tile", "return_padded"))
def discriminator_forward(x_nchw, params, *, batch_tile=4096, return_padded=False):
    """x_nchw: (B, 1, 28, 28) float32.  Returns logits (B, 10) fp32.

    With return_padded=True, returns the lane-dense (B, 128) fp32 buffer
    (lanes 10: are exactly zero) and skips the trailing slice pass.
    """
    w1, b1, w2, b2, w3, b3 = params
    B = x_nchw.shape[0]
    in_dim = w1.shape[0]          # 784
    out_dim = w3.shape[1]         # 10

    # Flatten (torch.nn.Flatten flattens all dims after batch, row-major) and
    # cast the streamed activations to bf16 (halves the dominant HBM read).
    x2d = x_nchw.reshape(B, -1).astype(jnp.bfloat16)
    assert x2d.shape[1] == in_dim

    tb = _choose_batch_tile(B, batch_tile)
    n_tiles = pl.cdiv(B, tb)      # ragged last block handled by Pallas;
                                  # OOB rows are masked on writeback.

    # Pad the last layer to 128 output lanes so the output store is a full
    # 128-wide vst (no masked partial stores).  Padded columns/bias are zero,
    # so padded logit lanes are exactly zero.
    out_pad = _round_up(out_dim, 128)                        # 128
    w3p = jnp.pad(w3, ((0, 0), (0, out_pad - out_dim)))      # (64, 128)
    b3p = jnp.pad(b3, (0, out_pad - out_dim)).reshape(1, -1) # (1, 128) fp32

    # Weights in bf16 (fp32 accumulation happens on the MXU); biases fp32 rows.
    w1b = w1.astype(jnp.bfloat16)
    w2b = w2.astype(jnp.bfloat16)
    w3b = w3p.astype(jnp.bfloat16)
    b1r = b1.reshape(1, -1).astype(jnp.float32)
    b2r = b2.reshape(1, -1).astype(jnp.float32)
    b3r = b3p.astype(jnp.float32)

    out = pl.pallas_call(
        _mlp_kernel,
        out_shape=jax.ShapeDtypeStruct((B, out_pad), jnp.float32),
        grid_spec=pltpu.PrefetchScalarGridSpec(
            num_scalar_prefetch=0,
            grid=(n_tiles,),
            in_specs=[
                pl.BlockSpec((tb, in_dim), lambda i: (i, 0)),     # x tile (bf16)
                pl.BlockSpec(w1b.shape, lambda i: (0, 0)),        # W1 (784,128) bf16
                pl.BlockSpec(b1r.shape, lambda i: (0, 0)),        # b1 (1,128) fp32
                pl.BlockSpec(w2b.shape, lambda i: (0, 0)),        # W2 (128,64) bf16
                pl.BlockSpec(b2r.shape, lambda i: (0, 0)),        # b2 (1,64) fp32
                pl.BlockSpec(w3b.shape, lambda i: (0, 0)),        # W3 (64,128) bf16 padded
                pl.BlockSpec(b3r.shape, lambda i: (0, 0)),        # b3 (1,128) fp32 padded
            ],
            out_specs=pl.BlockSpec((tb, out_pad), lambda i: (i, 0)),
        ),
        compiler_params=pltpu.CompilerParams(
            dimension_semantics=("parallel",),   # shards batch tiles across TCs (v7x)
            vmem_limit_bytes=48 << 20,           # clears v5e's 16 MiB default scoped
                                                 # limit; < v7x's 64 MiB physical VMEM
        ),
    )(x2d, w1b, b1r, w2b, b2r, w3b, b3r)

    if return_padded:
        return out                 # (B, 128); consumer indexes lanes 0:out_dim
    return out[:, :out_dim]        # (B, 10)


def init_params(key):
    """Deterministic init mimicking torch.nn.Linear default (U[-1/sqrt(in), 1/sqrt(in)]).
    Weights are stored already transposed: (in_features, out_features)."""
    dims = [(784, 128), (128, 64), (64, 10)]
    params = []
    for i, (din, dout) in enumerate(dims):
        kw, kb = jax.random.split(jax.random.fold_in(key, i))
        bound = 1.0 / jnp.sqrt(jnp.float32(din))
        w = jax.random.uniform(kw, (din, dout), jnp.float32, -bound, bound)
        b = jax.random.uniform(kb, (dout,), jnp.float32, -bound, bound)
        params.extend([w, b])
    return tuple(params)


def reference_forward(x_nchw, params):
    """Pure-JAX fp32 reference of the same forward pass (for correctness check)."""
    w1, b1, w2, b2, w3, b3 = params
    x = x_nchw.reshape(x_nchw.shape[0], -1)
    h1 = jnp.maximum(x @ w1 + b1, 0.0)
    h2 = jnp.maximum(h1 @ w2 + b2, 0.0)
    return h2 @ w3 + b3


if __name__ == "__main__":
    key = jax.random.PRNGKey(0)
    k_x, k_p = jax.random.split(key)

    # Small MNIST-like batch: (B=2, C=1, H=28, W=28) -> flatten -> 784 features.
    x = jax.random.normal(k_x, (2, 1, 28, 28), jnp.float32)
    params = init_params(k_p)

    out = discriminator_forward(x, params)
    out = jax.block_until_ready(out)

    ref = reference_forward(x, params)
    assert out.shape == (2, 10), out.shape
    # Tolerance relaxed vs. fp32 path: streamed operands are bf16 (fp32 accum).
    assert jnp.allclose(out, ref, atol=5e-2, rtol=5e-2), (
        f"max abs err {jnp.max(jnp.abs(out - ref))}")

    # Padded fast-path returns (B, 128) with zero lanes 10:; values must match.
    out_pad = jax.block_until_ready(
        discriminator_forward(x, params, return_padded=True))
    assert out_pad.shape == (2, 128), out_pad.shape
    assert jnp.allclose(out_pad[:, :10], out, atol=1e-6)
    assert jnp.all(out_pad[:, 10:] == 0.0)

    print("KERNEL_OK")
</pallas_src>

<mosaic_0001>
module attributes {stable_mosaic.version = 11 : i64} {
  func.func @_mlp_kernel(%arg0: i32, %arg1: memref<8x784xbf16, #tpu.memory_space<vmem>>, %arg2: memref<784x128xbf16, #tpu.memory_space<vmem>>, %arg3: memref<1x128xf32, #tpu.memory_space<vmem>>, %arg4: memref<128x64xbf16, #tpu.memory_space<vmem>>, %arg5: memref<1x64xf32, #tpu.memory_space<vmem>>, %arg6: memref<64x128xbf16, #tpu.memory_space<vmem>>, %arg7: memref<1x128xf32, #tpu.memory_space<vmem>>, %arg8: memref<8x128xf32, #tpu.memory_space<vmem>>) attributes {dimension_semantics = [#tpu.dimension_semantics<parallel>], iteration_bounds = array<i64: 1>, scalar_prefetch = 0 : i64, scratch_operands = 0 : i64, tpu.core_type = #tpu.core_type<tc>, window_params = [{transform_indices = @transform_0, window_bounds = array<i64: 8, 784>}, {pipeline_mode = #tpu.pipeline_mode<synchronous>, transform_indices = @transform_1, window_bounds = array<i64: 784, 128>}, {pipeline_mode = #tpu.pipeline_mode<synchronous>, transform_indices = @transform_2, window_bounds = array<i64: 1, 128>}, {pipeline_mode = #tpu.pipeline_mode<synchronous>, transform_indices = @transform_3, window_bounds = array<i64: 128, 64>}, {pipeline_mode = #tpu.pipeline_mode<synchronous>, transform_indices = @transform_4, window_bounds = array<i64: 1, 64>}, {pipeline_mode = #tpu.pipeline_mode<synchronous>, transform_indices = @transform_5, window_bounds = array<i64: 64, 128>}, {pipeline_mode = #tpu.pipeline_mode<synchronous>, transform_indices = @transform_6, window_bounds = array<i64: 1, 128>}, {transform_indices = @transform_7, window_bounds = array<i64: 8, 128>}]} {
    %c0 = arith.constant 0 : index
    %c0_0 = arith.constant 0 : index
    %0 = vector.load %arg1[%c0, %c0_0] : memref<8x784xbf16, #tpu.memory_space<vmem>>, vector<8x784xbf16>
    %c0_1 = arith.constant 0 : index
    %c0_2 = arith.constant 0 : index
    %1 = vector.load %arg2[%c0_1, %c0_2] : memref<784x128xbf16, #tpu.memory_space<vmem>>, vector<784x128xbf16>
    %cst = arith.constant dense<0.000000e+00> : vector<8x128xf32>
    %2 = tpu.matmul %0, %1, %cst {dimension_numbers = #tpu.dot_dimension_numbers<[1], [0], [0], [1], [0, 0, 1, 1], [], []>} : vector<8x784xbf16>, vector<784x128xbf16>, vector<8x128xf32> -> vector<8x128xf32>
    %c0_3 = arith.constant 0 : index
    %c0_4 = arith.constant 0 : index
    %3 = vector.load %arg3[%c0_3, %c0_4] : memref<1x128xf32, #tpu.memory_space<vmem>>, vector<1x128xf32>
    %4 = vector.broadcast %3 : vector<1x128xf32> to vector<8x128xf32>
    %5 = arith.addf %2, %4 : vector<8x128xf32>
    %cst_5 = arith.constant 0.000000e+00 : f32
    %6 = vector.broadcast %cst_5 : f32 to vector<8x128xf32>
    %7 = arith.maximumf %5, %6 : vector<8x128xf32>
    %8 = arith.truncf %7 : vector<8x128xf32> to vector<8x128xbf16>
    %c0_6 = arith.constant 0 : index
    %c0_7 = arith.constant 0 : index
    %9 = vector.load %arg4[%c0_6, %c0_7] : memref<128x64xbf16, #tpu.memory_space<vmem>>, vector<128x64xbf16>
    %cst_8 = arith.constant dense<0.000000e+00> : vector<8x64xf32>
    %10 = tpu.matmul %8, %9, %cst_8 {dimension_numbers = #tpu.dot_dimension_numbers<[1], [0], [0], [1], [0, 0, 1, 1], [], []>} : vector<8x128xbf16>, vector<128x64xbf16>, vector<8x64xf32> -> vector<8x64xf32>
    %c0_9 = arith.constant 0 : index
    %c0_10 = arith.constant 0 : index
    %11 = vector.load %arg5[%c0_9, %c0_10] : memref<1x64xf32, #tpu.memory_space<vmem>>, vector<1x64xf32>
    %12 = vector.broadcast %11 : vector<1x64xf32> to vector<8x64xf32>
    %13 = arith.addf %10, %12 : vector<8x64xf32>
    %cst_11 = arith.constant 0.000000e+00 : f32
    %14 = vector.broadcast %cst_11 : f32 to vector<8x64xf32>
    %15 = arith.maximumf %13, %14 : vector<8x64xf32>
    %16 = arith.truncf %15 : vector<8x64xf32> to vector<8x64xbf16>
    %c0_12 = arith.constant 0 : index
    %c0_13 = arith.constant 0 : index
    %17 = vector.load %arg6[%c0_12, %c0_13] : memref<64x128xbf16, #tpu.memory_space<vmem>>, vector<64x128xbf16>
    %cst_14 = arith.constant dense<0.000000e+00> : vector<8x128xf32>
    %18 = tpu.matmul %16, %17, %cst_14 {dimension_numbers = #tpu.dot_dimension_numbers<[1], [0], [0], [1], [0, 0, 1, 1], [], []>} : vector<8x64xbf16>, vector<64x128xbf16>, vector<8x128xf32> -> vector<8x128xf32>
    %c0_15 = arith.constant 0 : index
    %c0_16 = arith.constant 0 : index
    %19 = vector.load %arg7[%c0_15, %c0_16] : memref<1x128xf32, #tpu.memory_space<vmem>>, vector<1x128xf32>
    %20 = vector.broadcast %19 : vector<1x128xf32> to vector<8x128xf32>
    %21 = arith.addf %18, %20 : vector<8x128xf32>
    %c0_17 = arith.constant 0 : index
    %c0_18 = arith.constant 0 : index
    %22 = vector.load %arg8[%c0_17, %c0_18] : memref<8x128xf32, #tpu.memory_space<vmem>>, vector<8x128xf32>
    tpu.vector_store %arg8[%c0_17, %c0_18], %21 {strides = array<i32>} : memref<8x128xf32, #tpu.memory_space<vmem>>, vector<8x128xf32>,
    return
  }
  func.func @transform_0(%arg0: i32) -> (i32, i32) {
    %c0_i32 = arith.constant 0 : i32
    %c0_i32_0 = arith.constant 0 : i32
    return %arg0, %c0_i32 : i32, i32
  }
  func.func @transform_1(%arg0: i32) -> (i32, i32) {
    %c0_i32 = arith.constant 0 : i32
    %c0_i32_0 = arith.constant 0 : i32
    %c0_i32_1 = arith.constant 0 : i32
    return %c0_i32, %c0_i32_0 : i32, i32
  }
  func.func @transform_2(%arg0: i32) -> (i32, i32) {
    %c0_i32 = arith.constant 0 : i32
    %c0_i32_0 = arith.constant 0 : i32
    %c0_i32_1 = arith.constant 0 : i32
    return %c0_i32, %c0_i32_0 : i32, i32
  }
  func.func @transform_3(%arg0: i32) -> (i32, i32) {
    %c0_i32 = arith.constant 0 : i32
    %c0_i32_0 = arith.constant 0 : i32
    %c0_i32_1 = arith.constant 0 : i32
    return %c0_i32, %c0_i32_0 : i32, i32
  }
  func.func @transform_4(%arg0: i32) -> (i32, i32) {
    %c0_i32 = arith.constant 0 : i32
    %c0_i32_0 = arith.constant 0 : i32
    %c0_i32_1 = arith.constant 0 : i32
    return %c0_i32, %c0_i32_0 : i32, i32
  }
  func.func @transform_5(%arg0: i32) -> (i32, i32) {
    %c0_i32 = arith.constant 0 : i32
    %c0_i32_0 = arith.constant 0 : i32
    %c0_i32_1 = arith.constant 0 : i32
    return %c0_i32, %c0_i32_0 : i32, i32
  }
  func.func @transform_6(%arg0: i32) -> (i32, i32) {
    %c0_i32 = arith.constant 0 : i32
    %c0_i32_0 = arith.constant 0 : i32
    %c0_i32_1 = arith.constant 0 : i32
    return %c0_i32, %c0_i32_0 : i32, i32
  }
  func.func @transform_7(%arg0: i32) -> (i32, i32) {
    %c0_i32 = arith.constant 0 : i32
    %c0_i32_0 = arith.constant 0 : i32
    return %arg0, %c0_i32 : i32, i32
  }
}

</mosaic_0001>

<llo_original>
// kernel: discriminator_forward.1
$region0: #{discriminator_forward.1}
  #allocation0 [shape = 'u32[]', space=smem, size = 0x4, offset = 0x4, fixed_abs, tag = 'smem constant byte address 0x4 - core index']
  #allocation1 [shape = 'u32[144,128]{1,0:T(1,128)}', space=vmem, size = 0x12000, scoped, tag = 'internal scratch']
  %s0 = inlined_call_operand.vmem [shape: bf16[2,784], index: 0, kind: input, shape index: {}]
  %s1 = inlined_call_operand.vmem [shape: bf16[784,128], index: 1, kind: input, shape index: {}]
  %s2 = inlined_call_operand.vmem [shape: f32[1,128], index: 2, kind: input, shape index: {}]
  %s3 = inlined_call_operand.vmem [shape: bf16[128,64], index: 3, kind: input, shape index: {}]
  %s4 = inlined_call_operand.vmem [shape: f32[1,64], index: 4, kind: input, shape index: {}]
  %s5 = inlined_call_operand.vmem [shape: bf16[64,128], index: 5, kind: input, shape index: {}]
  %s6 = inlined_call_operand.vmem [shape: f32[1,128], index: 6, kind: input, shape index: {}]
  %s7 = inlined_call_operand.hbm [shape: f32[2,128], index: 7, kind: output, shape index: {}]
  %s8 = sld [smem:[#allocation0]]
  $region38: #{discriminator_forward.1} parent=0
    _
  %s10 = ssub.s32 1, %s8
  %s11 = scalar_select 0, %s10, %s8
  $region1: #{discriminator_forward.1} parent=0
    #allocation2 [shape = 'u8[4096]{0}', space=vmem, size = 0x1000, scoped, tag = 'output window, operand 0, single buffered']
    #allocation3 [shape = 's32[1]{0}', space=sflag, size = 0x4, scoped, tag = 'scoped memory for discriminator_forward.1']
    %12 = vsyncpa [#allocation3], 0
    // Predicated region
    $region2: #{discriminator_forward.1} parent=1 // pred_check
      _
    $region3: #{discriminator_forward.1} parent=1 // pred_check_branch
      %14 = sbr.rel (0) target = $region5
    $region4: #{discriminator_forward.1} parent=1 // pred_region
      _
    $region5: #{discriminator_forward.1} parent=1 // pred_fallthru
      _
    // Predicated region
    $region6: #{discriminator_forward.1} parent=1 // pred_check
      _
    $region7: #{discriminator_forward.1} parent=1 // pred_check_branch
      %16 = sbr.rel (0) target = $region9
    $region8: #{discriminator_forward.1} parent=1 // pred_region
      _
    $region9: #{discriminator_forward.1} parent=1 // pred_fallthru
      _
    // Predicated region
    $region10: #{discriminator_forward.1} parent=1 // pred_check
      _
    $region11: #{discriminator_forward.1} parent=1 // pred_check_branch
      %18 = sbr.rel (0) target = $region13
    $region12: #{discriminator_forward.1} parent=1 // pred_region
      _
    $region13: #{discriminator_forward.1} parent=1 // pred_fallthru
      _
    // Predicated region
    $region14: #{discriminator_forward.1} parent=1 // pred_check
      _
    $region15: #{discriminator_forward.1} parent=1 // pred_check_branch
      %20 = sbr.rel (0) target = $region17
    $region16: #{discriminator_forward.1} parent=1 // pred_region
      _
    $region17: #{discriminator_forward.1} parent=1 // pred_fallthru
      _
    // Predicated region
    $region18: #{discriminator_forward.1} parent=1 // pred_check
      _
    $region19: #{discriminator_forward.1} parent=1 // pred_check_branch
      %22 = sbr.rel (0) target = $region21
    $region20: #{discriminator_forward.1} parent=1 // pred_region
      _
    $region21: #{discriminator_forward.1} parent=1 // pred_fallthru
      _
    // Predicated region
    $region22: #{discriminator_forward.1} parent=1 // pred_check
      _
    $region23: #{discriminator_forward.1} parent=1 // pred_check_branch
      %24 = sbr.rel (0) target = $region25
    $region24: #{discriminator_forward.1} parent=1 // pred_region
      _
    $region25: #{discriminator_forward.1} parent=1 // pred_fallthru
      _
    // Predicated region
    $region26: #{discriminator_forward.1} parent=1 // pred_check
      _
    $region27: #{discriminator_forward.1} parent=1 // pred_check_branch
      %26 = sbr.rel (0) target = $region29
    $region28: #{discriminator_forward.1} parent=1 // pred_region
      _
    $region29: #{discriminator_forward.1} parent=1 // pred_fallthru
      _
    %v28 = vld [vmem:[%s0] sm:$0x7f]
    %v29 = vld [vmem:[%s0 + $0x7] sm:$0x7f]
    %v30 = vld [vmem:[%s0 + $0xe] sm:$0x7f]
    %v31 = vld [vmem:[%s0 + $0x15] sm:$0x7f]
    %v32 = vld [vmem:[%s1] sm:$0xf]
    %v33 = vld [vmem:[%s1 + $0x4] sm:$0xf]
    %v34 = vld [vmem:[%s1 + $0x8] sm:$0xf]
    %v35 = vld [vmem:[%s1 + $0xc] sm:$0xf]
    %v36 = vld [vmem:[%s1 + $0x10] sm:$0xf]
    %v37 = vld [vmem:[%s1 + $0x14] sm:$0xf]
    %v38 = vld [vmem:[%s1 + $0x18] sm:$0xf]
    %v39 = vld [vmem:[%s1 + $0x1c] sm:$0xf]
    %v40 = vld [vmem:[%s1 + $0x20] sm:$0xf]
    %v41 = vld [vmem:[%s1 + $0x24] sm:$0xf]
    %v42 = vld [vmem:[%s1 + $0x28] sm:$0xf]
    %v43 = vld [vmem:[%s1 + $0x2c] sm:$0xf]
    %v44 = vld [vmem:[%s1 + $0x30] sm:$0xf]
    %v45 = vld [vmem:[%s1 + $0x34] sm:$0xf]
    %v46 = vld [vmem:[%s1 + $0x38] sm:$0xf]
    %v47 = vld [vmem:[%s1 + $0x3c] sm:$0xf]
    %v48 = vld [vmem:[%s1 + $0x40] sm:$0xf]
    %v49 = vld [vmem:[%s1 + $0x44] sm:$0xf]
    %v50 = vld [vmem:[%s1 + $0x48] sm:$0xf]
    %v51 = vld [vmem:[%s1 + $0x4c] sm:$0xf]
    %v52 = vld [vmem:[%s1 + $0x50] sm:$0xf]
    %v53 = vld [vmem:[%s1 + $0x54] sm:$0xf]
    %v54 = vld [vmem:[%s1 + $0x58] sm:$0xf]
    %v55 = vld [vmem:[%s1 + $0x5c] sm:$0xf]
    %v56 = vld [vmem:[%s1 + $0x60] sm:$0xf]
    %v57 = vld [vmem:[%s1 + $0x64] sm:$0xf]
    %v58 = vld [vmem:[%s1 + $0x68] sm:$0xf]
    %v59 = vld [vmem:[%s1 + $0x6c] sm:$0xf]
    %v60 = vld [vmem:[%s1 + $0x70] sm:$0xf]
    %v61 = vld [vmem:[%s1 + $0x74] sm:$0xf]
    %v62 = vld [vmem:[%s1 + $0x78] sm:$0xf]
    %v63 = vld [vmem:[%s1 + $0x7c] sm:$0xf]
    %v64 = vld [vmem:[%s1 + $0x80] sm:$0xf]
    %v65 = vld [vmem:[%s1 + $0x84] sm:$0xf]
    %v66 = vld [vmem:[%s1 + $0x88] sm:$0xf]
    %v67 = vld [vmem:[%s1 + $0x8c] sm:$0xf]
    %v68 = vld [vmem:[%s1 + $0x90] sm:$0xf]
    %v69 = vld [vmem:[%s1 + $0x94] sm:$0xf]
    %v70 = vld [vmem:[%s1 + $0x98] sm:$0xf]
    %v71 = vld [vmem:[%s1 + $0x9c] sm:$0xf]
    %v72 = vld [vmem:[%s1 + $0xa0] sm:$0xf]
    %v73 = vld [vmem:[%s1 + $0xa4] sm:$0xf]
    %v74 = vld [vmem:[%s1 + $0xa8] sm:$0xf]
    %v75 = vld [vmem:[%s1 + $0xac] sm:$0xf]
    %v76 = vld [vmem:[%s1 + $0xb0] sm:$0xf]
    %v77 = vld [vmem:[%s1 + $0xb4] sm:$0xf]
    %v78 = vld [vmem:[%s1 + $0xb8] sm:$0xf]
    %v79 = vld [vmem:[%s1 + $0xbc] sm:$0xf]
    %v80 = vld [vmem:[%s1 + $0xc0] sm:$0xf]
    %v81 = vld [vmem:[%s1 + $0xc4] sm:$0xf]
    %v82 = vld [vmem:[%s1 + $0xc8] sm:$0xf]
    %v83 = vld [vmem:[%s1 + $0xcc] sm:$0xf]
    %v84 = vld [vmem:[%s1 + $0xd0] sm:$0xf]
    %v85 = vld [vmem:[%s1 + $0xd4] sm:$0xf]
    %v86 = vld [vmem:[%s1 + $0xd8] sm:$0xf]
    %v87 = vld [vmem:[%s1 + $0xdc] sm:$0xf]
    %v88 = vld [vmem:[%s1 + $0xe0] sm:$0xf]
    %v89 = vld [vmem:[%s1 + $0xe4] sm:$0xf]
    %v90 = vld [vmem:[%s1 + $0xe8] sm:$0xf]
    %v91 = vld [vmem:[%s1 + $0xec] sm:$0xf]
    %v92 = vld [vmem:[%s1 + $0xf0] sm:$0xf]
    %v93 = vld [vmem:[%s1 + $0xf4] sm:$0xf]
    %v94 = vld [vmem:[%s1 + $0xf8] sm:$0xf]
    %v95 = vld [vmem:[%s1 + $0xfc] sm:$0xf]
    %v96 = vld [vmem:[%s1 + $0x100] sm:$0xf]
    %v97 = vld [vmem:[%s1 + $0x104] sm:$0xf]
    %v98 = vld [vmem:[%s1 + $0x108] sm:$0xf]
    %v99 = vld [vmem:[%s1 + $0x10c] sm:$0xf]
    %v100 = vld [vmem:[%s1 + $0x110] sm:$0xf]
    %v101 = vld [vmem:[%s1 + $0x114] sm:$0xf]
    %v102 = vld [vmem:[%s1 + $0x118] sm:$0xf]
    %v103 = vld [vmem:[%s1 + $0x11c] sm:$0xf]
    %v104 = vld [vmem:[%s1 + $0x120] sm:$0xf]
    %v105 = vld [vmem:[%s1 + $0x124] sm:$0xf]
    %v106 = vld [vmem:[%s1 + $0x128] sm:$0xf]
    %v107 = vld [vmem:[%s1 + $0x12c] sm:$0xf]
    %v108 = vld [vmem:[%s1 + $0x130] sm:$0xf]
    %v109 = vld [vmem:[%s1 + $0x134] sm:$0xf]
    %v110 = vld [vmem:[%s1 + $0x138] sm:$0xf]
    %v111 = vld [vmem:[%s1 + $0x13c] sm:$0xf]
    %v112 = vld [vmem:[%s1 + $0x140] sm:$0xf]
    %v113 = vld [vmem:[%s1 + $0x144] sm:$0xf]
    %v114 = vld [vmem:[%s1 + $0x148] sm:$0xf]
    %v115 = vld [vmem:[%s1 + $0x14c] sm:$0xf]
    %v116 = vld [vmem:[%s1 + $0x150] sm:$0xf]
    %v117 = vld [vmem:[%s1 + $0x154] sm:$0xf]
    %v118 = vld [vmem:[%s1 + $0x158] sm:$0xf]
    %v119 = vld [vmem:[%s1 + $0x15c] sm:$0xf]
    %v120 = vld [vmem:[%s1 + $0x160] sm:$0xf]
    %v121 = vld [vmem:[%s1 + $0x164] sm:$0xf]
    %v122 = vld [vmem:[%s1 + $0x168] sm:$0xf]
    %v123 = vld [vmem:[%s1 + $0x16c] sm:$0xf]
    %v124 = vld [vmem:[%s1 + $0x170] sm:$0xf]
    %v125 = vld [vmem:[%s1 + $0x174] sm:$0xf]
    %v126 = vld [vmem:[%s1 + $0x178] sm:$0xf]
    %v127 = vld [vmem:[%s1 + $0x17c] sm:$0xf]
    %v128 = vld [vmem:[%s1 + $0x180] sm:$0xf]
    %v129 = vld [vmem:[%s1 + $0x184] sm:$0xf]
    %v130 = vld [vmem:[%s2] sm:$0x1]
    %v132 = vlaneseq
    %v133 = vshrl.u32 %v132, 7
    %v134 = vsub.s32 0, %v133
    %v135 = vrot.slane %v130, %v134
    %v141 = vcombine.low %v28, %v29
    %v142 = vcombine.high %v28, %v29
    %v143 = vcombine.low %v30, %v31
    %v144 = vcombine.high %v30, %v31
    %v146 = vunpack.c.l.s4 1966171168
    %v147 = vunpack.c.0.s8 %v146
    %v148 = vlaneseq
    %v149 = vshrl.u32 %v148, 7
    %v150 = vsub.s32 %v147, %v149
    %v151 = vrot.slane %v141, %v150
    %v153 = vunpack.c.l.s4 1966171168
    %v154 = vunpack.c.0.s8 %v153
    %v155 = vlaneseq
    %v156 = vshrl.u32 %v155, 7
    %v157 = vsub.s32 %v154, %v156
    %v158 = vrot.slane %v142, %v157
    %v160 = vunpack.c.l.s4 1966171168
    %v161 = vunpack.c.0.s8 %v160
    %v162 = vlaneseq
    %v163 = vshrl.u32 %v162, 7
    %v164 = vsub.s32 %v161, %v163
    %v165 = vrot.slane %v143, %v164
    %v167 = vunpack.c.l.s4 1966171168
    %v168 = vunpack.c.0.s8 %v167
    %v169 = vlaneseq
    %v170 = vshrl.u32 %v169, 7
    %v171 = vsub.s32 %v168, %v170
    %v172 = vrot.slane %v144, %v171
    %v173 = vcombine.low %v151, %v165
    %v174 = vcombine.high %v151, %v165
    %v175 = vcombine.low %v158, %v172
    %v176 = vcombine.high %v158, %v172
    %v178 = vunpack.c.l.s4 1966171168
    %v179 = vunpack.c.0.s8 %v178
    %v180 = vlaneseq
    %v181 = vshrl.u32 %v180, 7
    %v182 = vsub.s32 %v179, %v181
    %v183 = vrot.slane %v173, %v182
    %v185 = vunpack.c.l.s4 1966171168
    %v186 = vunpack.c.0.s8 %v185
    %v187 = vlaneseq
    %v188 = vshrl.u32 %v187, 7
    %v189 = vsub.s32 %v186, %v188
    %v190 = vrot.slane %v175, %v189
    %v192 = vunpack.c.l.s4 1966171168
    %v193 = vunpack.c.0.s8 %v192
    %v194 = vlaneseq
    %v195 = vshrl.u32 %v194, 7
    %v196 = vsub.s32 %v193, %v195
    %v197 = vrot.slane %v174, %v196
    %v199 = vunpack.c.l.s4 1966171168
    %v200 = vunpack.c.0.s8 %v199
    %v201 = vlaneseq
    %v202 = vshrl.u32 %v201, 7
    %v203 = vsub.s32 %v200, %v202
    %v204 = vrot.slane %v176, %v203
    %v205 = vcombine.high %v183, %v183
    %v206 = vcombine.high %v190, %v190
    %v207 = vcombine.high %v197, %v197
    %v312 = vunpack.c.l.b16 %v32
    %v313 = vunpack.c.l.b16 %v33
    %v314 = vunpack.c.l.b16 %v34
    %v315 = vunpack.c.l.b16 %v35
    %v316 = vunpack.c.l.b16 %v36
    %v317 = vunpack.c.l.b16 %v37
    %v318 = vunpack.c.l.b16 %v38
    %v319 = vunpack.c.l.b16 %v39
    %v320 = vunpack.c.l.b16 %v40
    %v321 = vunpack.c.l.b16 %v41
    %v322 = vunpack.c.l.b16 %v42
    %v323 = vunpack.c.l.b16 %v43
    %v324 = vunpack.c.l.b16 %v44
    %v325 = vunpack.c.l.b16 %v45
    %v326 = vunpack.c.l.b16 %v46
    %v327 = vunpack.c.l.b16 %v47
    %v328 = vunpack.c.l.b16 %v48
    %v329 = vunpack.c.l.b16 %v49
    %v330 = vunpack.c.l.b16 %v50
    %v331 = vunpack.c.l.b16 %v51
    %v332 = vunpack.c.l.b16 %v52
    %v333 = vunpack.c.l.b16 %v53
    %v334 = vunpack.c.l.b16 %v54
    %v335 = vunpack.c.l.b16 %v55
    %v336 = vunpack.c.l.b16 %v56
    %v337 = vunpack.c.l.b16 %v57
    %v338 = vunpack.c.l.b16 %v58
    %v339 = vunpack.c.l.b16 %v59
    %v340 = vunpack.c.l.b16 %v60
    %v341 = vunpack.c.l.b16 %v61
    %v342 = vunpack.c.l.b16 %v62
    %v343 = vunpack.c.l.b16 %v63
    %v344 = vunpack.c.l.b16 %v64
    %v345 = vunpack.c.l.b16 %v65
    %v346 = vunpack.c.l.b16 %v66
    %v347 = vunpack.c.l.b16 %v67
    %v348 = vunpack.c.l.b16 %v68
    %v349 = vunpack.c.l.b16 %v69
    %v350 = vunpack.c.l.b16 %v70
    %v351 = vunpack.c.l.b16 %v71
    %v352 = vunpack.c.l.b16 %v72
    %v353 = vunpack.c.l.b16 %v73
    %v354 = vunpack.c.l.b16 %v74
    %v355 = vunpack.c.l.b16 %v75
    %v356 = vunpack.c.l.b16 %v76
    %v357 = vunpack.c.l.b16 %v77
    %v358 = vunpack.c.l.b16 %v78
    %v359 = vunpack.c.l.b16 %v79
    %v360 = vunpack.c.l.b16 %v80
    %v361 = vunpack.c.l.b16 %v81
    %v362 = vunpack.c.l.b16 %v82
    %v363 = vunpack.c.l.b16 %v83
    %v364 = vunpack.c.l.b16 %v84
    %v365 = vunpack.c.l.b16 %v85
    %v366 = vunpack.c.l.b16 %v86
    %v367 = vunpack.c.l.b16 %v87
    %v368 = vunpack.c.l.b16 %v88
    %v369 = vunpack.c.l.b16 %v89
    %v370 = vunpack.c.l.b16 %v90
    %v371 = vunpack.c.l.b16 %v91
    %v372 = vunpack.c.l.b16 %v92
    %v373 = vunpack.c.l.b16 %v93
    %v374 = vunpack.c.l.b16 %v94
    %v375 = vunpack.c.l.b16 %v95
    %v376 = vunpack.c.l.b16 %v96
    %v377 = vunpack.c.l.b16 %v97
    %v378 = vunpack.c.l.b16 %v98
    %v379 = vunpack.c.l.b16 %v99
    %v380 = vunpack.c.l.b16 %v100
    %v381 = vunpack.c.l.b16 %v101
    %v382 = vunpack.c.l.b16 %v102
    %v383 = vunpack.c.l.b16 %v103
    %v384 = vunpack.c.l.b16 %v104
    %v385 = vunpack.c.l.b16 %v105
    %v386 = vunpack.c.l.b16 %v106
    %v387 = vunpack.c.l.b16 %v107
    %v388 = vunpack.c.l.b16 %v108
    %v389 = vunpack.c.l.b16 %v109
    %v390 = vunpack.c.l.b16 %v110
    %v391 = vunpack.c.l.b16 %v111
    %v392 = vunpack.c.l.b16 %v112
    %v393 = vunpack.c.l.b16 %v113
    %v394 = vunpack.c.l.b16 %v114
    %v395 = vunpack.c.l.b16 %v115
    %v396 = vunpack.c.l.b16 %v116
    %v397 = vunpack.c.l.b16 %v117
    %v398 = vunpack.c.l.b16 %v118
    %v399 = vunpack.c.l.b16 %v119
    %v400 = vunpack.c.l.b16 %v120
    %v401 = vunpack.c.l.b16 %v121
    %v402 = vunpack.c.l.b16 %v122
    %v403 = vunpack.c.l.b16 %v123
    %v404 = vunpack.c.l.b16 %v124
    %v405 = vunpack.c.l.b16 %v125
    %v406 = vunpack.c.l.b16 %v126
    %v407 = vunpack.c.l.b16 %v127
    %v408 = vunpack.c.l.b16 %v128
    %v409 = vunpack.c.l.b16 %v129
    %v410 = vpack.c.b16 %v313, %v312
    %v411 = vpack.c.b16 %v315, %v314
    %v412 = vpack.c.b16 %v317, %v316
    %v413 = vpack.c.b16 %v319, %v318
    %v414 = vpack.c.b16 %v321, %v320
    %v415 = vpack.c.b16 %v323, %v322
    %v416 = vpack.c.b16 %v325, %v324
    %v417 = vpack.c.b16 %v327, %v326
    %v418 = vpack.c.b16 %v329, %v328
    %v419 = vpack.c.b16 %v331, %v330
    %v420 = vpack.c.b16 %v333, %v332
    %v421 = vpack.c.b16 %v335, %v334
    %v422 = vpack.c.b16 %v337, %v336
    %v423 = vpack.c.b16 %v339, %v338
    %v424 = vpack.c.b16 %v341, %v340
    %v425 = vpack.c.b16 %v343, %v342
    %v426 = vpack.c.b16 %v345, %v344
    %v427 = vpack.c.b16 %v347, %v346
    %v428 = vpack.c.b16 %v349, %v348
    %v429 = vpack.c.b16 %v351, %v350
    %v430 = vpack.c.b16 %v353, %v352
    %v431 = vpack.c.b16 %v355, %v354
    %v432 = vpack.c.b16 %v357, %v356
    %v433 = vpack.c.b16 %v359, %v358
    %v434 = vpack.c.b16 %v361, %v360
    %v435 = vpack.c.b16 %v363, %v362
    %v436 = vpack.c.b16 %v365, %v364
    %v437 = vpack.c.b16 %v367, %v366
    %v438 = vpack.c.b16 %v369, %v368
    %v439 = vpack.c.b16 %v371, %v370
    %v440 = vpack.c.b16 %v373, %v372
    %v441 = vpack.c.b16 %v375, %v374
    %v442 = vpack.c.b16 %v377, %v376
    %v443 = vpack.c.b16 %v379, %v378
    %v444 = vpack.c.b16 %v381, %v380
    %v445 = vpack.c.b16 %v383, %v382
    %v446 = vpack.c.b16 %v385, %v384
    %v447 = vpack.c.b16 %v387, %v386
    %v448 = vpack.c.b16 %v389, %v388
    %v449 = vpack.c.b16 %v391, %v390
    %v450 = vpack.c.b16 %v393, %v392
    %v451 = vpack.c.b16 %v395, %v394
    %v452 = vpack.c.b16 %v397, %v396
    %v453 = vpack.c.b16 %v399, %v398
    %v454 = vpack.c.b16 %v401, %v400
    %v455 = vpack.c.b16 %v403, %v402
    %v456 = vpack.c.b16 %v405, %v404
    %v457 = vpack.c.b16 %v407, %v406
    %v458 = vpack.c.b16 %v409, %v408
    %vm508 = vcmask 130048
    %v510 = vsel %vm508, %v206, 0
    %512 = vmatprep.subr.bf16.mxu0 0
    %513 = vmatpush1.bf16.msra.mxu0 %v410
    %514 = vmatprep.subr.bf16.mxu0 0
    %515 = vmatpush1.bf16.msra.mxu0 %v411
    %516 = vmatprep.subr.bf16.mxu0 0
    %517 = vmatpush1.bf16.msra.mxu0 %v412
    %518 = vmatprep.subr.bf16.mxu0 0
    %519 = vmatpush1.bf16.msra.mxu0 %v413
    %520 = vmatprep.subr.bf16.mxu0 0
    %521 = vmatpush1.bf16.msra.mxu0 %v414
    %522 = vmatprep.subr.bf16.mxu0 0
    %523 = vmatpush1.bf16.msra.mxu0 %v415
    %524 = vmatprep.subr.bf16.mxu0 0
    %525 = vmatpush1.bf16.msra.mxu0 %v416
    %526 = vmatprep.subr.bf16.mxu0 0
    %527 = vmatpush1.bf16.msra.mxu0 %v417
    %528 = vmatprep.subr.bf16.mxu0 0
    %529 = vmatpush1.bf16.msra.mxu0 %v418
    %530 = vmatprep.subr.bf16.mxu0 0
    %531 = vmatpush1.bf16.msra.mxu0 %v419
    %532 = vmatprep.subr.bf16.mxu0 0
    %533 = vmatpush1.bf16.msra.mxu0 %v420
    %534 = vmatprep.subr.bf16.mxu0 0
    %535 = vmatpush1.bf16.msra.mxu0 %v421
    %536 = vmatprep.subr.bf16.mxu0 0
    %537 = vmatpush1.bf16.msra.mxu0 %v422
    %538 = vmatprep.subr.bf16.mxu0 0
    %539 = vmatpush1.bf16.msra.mxu0 %v423
    %540 = vmatprep.subr.bf16.mxu0 0
    %541 = vmatpush1.bf16.msra.mxu0 %v424
    %542 = vmatprep.subr.bf16.mxu0 0
    %543 = vmatpush1.bf16.msra.mxu0 %v425
    %544 = vmatprep.mubr.bf16.mxu0 %v197
    %545 = vmatmul.mubr.bf16.gmra.mrb[0].mxu0 %v183
    %v546 = vpop.f32.mrb[0].mxu0
    %v547 = vadd.f32 %v135, %v546
    %v548 = vpop.f32.mrb[0].mxu0
    %v549 = vpop.f32.mrb[0].mxu0
    %v550 = vpop.f32.mrb[0].mxu0
    %551 = vdwg.mxu0
    %552 = vmatprep.subr.bf16.mxu0 0
    %553 = vmatpush1.bf16.msra.mxu0 %v426
    %554 = vmatprep.subr.bf16.mxu0 0
    %555 = vmatpush1.bf16.msra.mxu0 %v427
    %556 = vmatprep.subr.bf16.mxu0 0
    %557 = vmatpush1.bf16.msra.mxu0 %v428
    %558 = vmatprep.subr.bf16.mxu0 0
    %559 = vmatpush1.bf16.msra.mxu0 %v429
    %560 = vmatprep.subr.bf16.mxu0 0
    %561 = vmatpush1.bf16.msra.mxu0 %v430
    %562 = vmatprep.subr.bf16.mxu0 0
    %563 = vmatpush1.bf16.msra.mxu0 %v431
    %564 = vmatprep.subr.bf16.mxu0 0
    %565 = vmatpush1.bf16.msra.mxu0 %v432
    %566 = vmatprep.subr.bf16.mxu0 0
    %567 = vmatpush1.bf16.msra.mxu0 %v433
    %568 = vmatprep.subr.bf16.mxu0 0
    %569 = vmatpush1.bf16.msra.mxu0 %v434
    %570 = vmatprep.subr.bf16.mxu0 0
    %571 = vmatpush1.bf16.msra.mxu0 %v435
    %572 = vmatprep.subr.bf16.mxu0 0
    %573 = vmatpush1.bf16.msra.mxu0 %v436
    %574 = vmatprep.subr.bf16.mxu0 0
    %575 = vmatpush1.bf16.msra.mxu0 %v437
    %576 = vmatprep.subr.bf16.mxu0 0
    %577 = vmatpush1.bf16.msra.mxu0 %v438
    %578 = vmatprep.subr.bf16.mxu0 0
    %579 = vmatpush1.bf16.msra.mxu0 %v439
    %580 = vmatprep.subr.bf16.mxu0 0
    %581 = vmatpush1.bf16.msra.mxu0 %v440
    %582 = vmatprep.subr.bf16.mxu0 0
    %583 = vmatpush1.bf16.msra.mxu0 %v441
    %584 = vmatprep.mubr.bf16.mxu0 %v207
    %585 = vmatmul.mubr.bf16.gmra.mrb[0].mxu0 %v205
    %v586 = vpop.f32.mrb[0].mxu0
    %v587 = vadd.f32 %v547, %v586
    %v588 = vpop.f32.mrb[0].mxu0
    %v589 = vpop.f32.mrb[0].mxu0
    %v590 = vpop.f32.mrb[0].mxu0
    %591 = vdwg.mxu0
    %592 = vmatprep.subr.bf16.mxu0 0
    %593 = vmatpush1.bf16.msra.mxu0 %v442
    %594 = vmatprep.subr.bf16.mxu0 0
    %595 = vmatpush1.bf16.msra.mxu0 %v443
    %596 = vmatprep.subr.bf16.mxu0 0
    %597 = vmatpush1.bf16.msra.mxu0 %v444
    %598 = vmatprep.subr.bf16.mxu0 0
    %599 = vmatpush1.bf16.msra.mxu0 %v445
    %600 = vmatprep.subr.bf16.mxu0 0
    %601 = vmatpush1.bf16.msra.mxu0 %v446
    %602 = vmatprep.subr.bf16.mxu0 0
    %603 = vmatpush1.bf16.msra.mxu0 %v447
    %604 = vmatprep.subr.bf16.mxu0 0
    %605 = vmatpush1.bf16.msra.mxu0 %v448
    %606 = vmatprep.subr.bf16.mxu0 0
    %607 = vmatpush1.bf16.msra.mxu0 %v449
    %608 = vmatprep.subr.bf16.mxu0 0
    %609 = vmatpush1.bf16.msra.mxu0 %v450
    %610 = vmatprep.subr.bf16.mxu0 0
    %611 = vmatpush1.bf16.msra.mxu0 %v451
    %612 = vmatprep.subr.bf16.mxu0 0
    %613 = vmatpush1.bf16.msra.mxu0 %v452
    %614 = vmatprep.subr.bf16.mxu0 0
    %615 = vmatpush1.bf16.msra.mxu0 %v453
    %616 = vmatprep.subr.bf16.mxu0 0
    %617 = vmatpush1.bf16.msra.mxu0 %v454
    %618 = vmatprep.subr.bf16.mxu0 0
    %619 = vmatpush1.bf16.msra.mxu0 %v455
    %620 = vmatprep.subr.bf16.mxu0 0
    %621 = vmatpush1.bf16.msra.mxu0 %v456
    %622 = vmatprep.subr.bf16.mxu0 0
    %623 = vmatpush1.bf16.msra.mxu0 %v457
    %624 = vmatprep.mubr.bf16.mxu0 %v204
    %625 = vmatmul.mubr.bf16.gmra.mrb[0].mxu0 %v190
    %v626 = vpop.f32.mrb[0].mxu0
    %v627 = vadd.f32 %v587, %v626
    %v628 = vpop.f32.mrb[0].mxu0
    %v629 = vpop.f32.mrb[0].mxu0
    %v630 = vpop.f32.mrb[0].mxu0
    %631 = vdwg.mxu0
    %632 = vmatprep.subr.bf16.mxu0 0
    %633 = vmatpush1.bf16.msra.mxu0 %v458
    %634 = vmatprep.subr.bf16.mxu0 0
    %635 = vmatpush1.bf16.msra.mxu0 0
    %636 = vmatprep.subr.bf16.mxu0 0
    %637 = vmatpush1.bf16.msra.mxu0 0
    %638 = vmatprep.subr.bf16.mxu0 0
    %639 = vmatpush1.bf16.msra.mxu0 0
    %640 = vmatprep.subr.bf16.mxu0 0
    %641 = vmatpush1.bf16.msra.mxu0 0
    %642 = vmatprep.subr.bf16.mxu0 0
    %643 = vmatpush1.bf16.msra.mxu0 0
    %644 = vmatprep.subr.bf16.mxu0 0
    %645 = vmatpush1.bf16.msra.mxu0 0
    %646 = vmatprep.subr.bf16.mxu0 0
    %647 = vmatpush1.bf16.msra.mxu0 0
    %648 = vmatprep.subr.bf16.mxu0 0
    %649 = vmatpush1.bf16.msra.mxu0 0
    %650 = vmatprep.subr.bf16.mxu0 0
    %651 = vmatpush1.bf16.msra.mxu0 0
    %652 = vmatprep.subr.bf16.mxu0 0
    %653 = vmatpush1.bf16.msra.mxu0 0
    %654 = vmatprep.subr.bf16.mxu0 0
    %655 = vmatpush1.bf16.msra.mxu0 0
    %656 = vmatprep.subr.bf16.mxu0 0
    %657 = vmatpush1.bf16.msra.mxu0 0
    %658 = vmatprep.subr.bf16.mxu0 0
    %659 = vmatpush1.bf16.msra.mxu0 0
    %660 = vmatprep.subr.bf16.mxu0 0
    %661 = vmatpush1.bf16.msra.mxu0 0
    %662 = vmatprep.subr.bf16.mxu0 0
    %663 = vmatpush1.bf16.msra.mxu0 0
    %664 = vmatprep.mubr.bf16.mxu0 0
    %665 = vmatmul.mubr.bf16.gmra.mrb[0].mxu0 %v510
    %v666 = vpop.f32.mrb[0].mxu0
    %v667 = vadd.f32 %v627, %v666
    %v668 = vpop.f32.mrb[0].mxu0
    %v669 = vpop.f32.mrb[0].mxu0
    %v670 = vpop.f32.mrb[0].mxu0
    %671 = vdwg.mxu0
    %v672 = vmax.f32 %v667, 0.0
    %v673 = vpack.c.bf16 %v672, %v672
    %v674 = vld [vmem:[%s3] sm:$0xf]
    %v675 = vld [vmem:[%s3 + $0x4] sm:$0xf]
    %v676 = vld [vmem:[%s3 + $0x8] sm:$0xf]
    %v677 = vld [vmem:[%s3 + $0xc] sm:$0xf]
    %v678 = vld [vmem:[%s3 + $0x10] sm:$0xf]
    %v679 = vld [vmem:[%s3 + $0x14] sm:$0xf]
    %v680 = vld [vmem:[%s3 + $0x18] sm:$0xf]
    %v681 = vld [vmem:[%s3 + $0x1c] sm:$0xf]
    %v682 = vld [vmem:[%s3 + $0x20] sm:$0xf]
    %v683 = vld [vmem:[%s3 + $0x24] sm:$0xf]
    %v684 = vld [vmem:[%s3 + $0x28] sm:$0xf]
    %v685 = vld [vmem:[%s3 + $0x2c] sm:$0xf]
    %v686 = vld [vmem:[%s3 + $0x30] sm:$0xf]
    %v687 = vld [vmem:[%s3 + $0x34] sm:$0xf]
    %v688 = vld [vmem:[%s3 + $0x38] sm:$0xf]
    %v689 = vld [vmem:[%s3 + $0x3c] sm:$0xf]
    %v690 = vld [vmem:[%s4] sm:$0x1]
    %v692 = vlaneseq
    %v693 = vshrl.u32 %v692, 7
    %v694 = vsub.s32 0, %v693
    %v695 = vrot.slane %v690, %v694
    %v713 = vunpack.c.l.b16 %v674
    %v714 = vunpack.c.l.b16 %v675
    %v715 = vunpack.c.l.b16 %v676
    %v716 = vunpack.c.l.b16 %v677
    %v717 = vunpack.c.l.b16 %v678
    %v718 = vunpack.c.l.b16 %v679
    %v719 = vunpack.c.l.b16 %v680
    %v720 = vunpack.c.l.b16 %v681
    %v721 = vunpack.c.l.b16 %v682
    %v722 = vunpack.c.l.b16 %v683
    %v723 = vunpack.c.l.b16 %v684
    %v724 = vunpack.c.l.b16 %v685
    %v725 = vunpack.c.l.b16 %v686
    %v726 = vunpack.c.l.b16 %v687
    %v727 = vunpack.c.l.b16 %v688
    %v728 = vunpack.c.l.b16 %v689
    %v729 = vpack.c.b16 %v714, %v713
    %v730 = vpack.c.b16 %v716, %v715
    %v731 = vpack.c.b16 %v718, %v717
    %v732 = vpack.c.b16 %v720, %v719
    %v733 = vpack.c.b16 %v722, %v721
    %v734 = vpack.c.b16 %v724, %v723
    %v735 = vpack.c.b16 %v726, %v725
    %v736 = vpack.c.b16 %v728, %v727
    %745 = vmatprep.subr.bf16.mxu0 0
    %746 = vmatpush1.bf16.msra.mxu0 %v729
    %747 = vmatprep.subr.bf16.mxu0 0
    %748 = vmatpush1.bf16.msra.mxu0 %v730
    %749 = vmatprep.subr.bf16.mxu0 0
    %750 = vmatpush1.bf16.msra.mxu0 %v731
    %751 = vmatprep.subr.bf16.mxu0 0
    %752 = vmatpush1.bf16.msra.mxu0 %v732
    %753 = vmatprep.subr.bf16.mxu0 0
    %754 = vmatpush1.bf16.msra.mxu0 %v733
    %755 = vmatprep.subr.bf16.mxu0 0
    %756 = vmatpush1.bf16.msra.mxu0 %v734
    %757 = vmatprep.subr.bf16.mxu0 0
    %758 = vmatpush1.bf16.msra.mxu0 %v735
    %759 = vmatprep.subr.bf16.mxu0 0
    %760 = vmatpush1.bf16.msra.mxu0 %v736
    %761 = vmatprep.subr.bf16.mxu0 0
    %762 = vmatpush1.bf16.msra.mxu0 0
    %763 = vmatprep.subr.bf16.mxu0 0
    %764 = vmatpush1.bf16.msra.mxu0 0
    %765 = vmatprep.subr.bf16.mxu0 0
    %766 = vmatpush1.bf16.msra.mxu0 0
    %767 = vmatprep.subr.bf16.mxu0 0
    %768 = vmatpush1.bf16.msra.mxu0 0
    %769 = vmatprep.subr.bf16.mxu0 0
    %770 = vmatpush1.bf16.msra.mxu0 0
    %771 = vmatprep.subr.bf16.mxu0 0
    %772 = vmatpush1.bf16.msra.mxu0 0
    %773 = vmatprep.subr.bf16.mxu0 0
    %774 = vmatpush1.bf16.msra.mxu0 0
    %775 = vmatprep.subr.bf16.mxu0 0
    %776 = vmatpush1.bf16.msra.mxu0 0
    %777 = vmatprep.mubr.bf16.mxu0 0
    %778 = vmatmul.mubr.bf16.gmra.mrb[0].mxu0 %v673
    %v779 = vpop.f32.mrb[0].mxu0
    %v780 = vadd.f32 %v695, %v779
    %v781 = vpop.f32.mrb[0].mxu0
    %v782 = vpop.f32.mrb[0].mxu0
    %v783 = vpop.f32.mrb[0].mxu0
    %784 = vdwg.mxu0
    %v785 = vmax.f32 %v780, 0.0
    %v786 = vpack.c.bf16 %v785, %v785
    %v787 = vld [vmem:[%s5] sm:$0xf]
    %v788 = vld [vmem:[%s5 + $0x4] sm:$0xf]
    %v789 = vld [vmem:[%s5 + $0x8] sm:$0xf]
    %v790 = vld [vmem:[%s5 + $0xc] sm:$0xf]
    %v791 = vld [vmem:[%s5 + $0x10] sm:$0xf]
    %v792 = vld [vmem:[%s5 + $0x14] sm:$0xf]
    %v793 = vld [vmem:[%s5 + $0x18] sm:$0xf]
    %v794 = vld [vmem:[%s5 + $0x1c] sm:$0xf]
    %v795 = vld [vmem:[%s6] sm:$0x1]
    %v797 = vlaneseq
    %v798 = vshrl.u32 %v797, 7
    %v799 = vsub.s32 0, %v798
    %v800 = vrot.slane %v795, %v799
    %v810 = vunpack.c.l.b16 %v787
    %v811 = vunpack.c.l.b16 %v788
    %v812 = vunpack.c.l.b16 %v789
    %v813 = vunpack.c.l.b16 %v790
    %v814 = vunpack.c.l.b16 %v791
    %v815 = vunpack.c.l.b16 %v792
    %v816 = vunpack.c.l.b16 %v793
    %v817 = vunpack.c.l.b16 %v794
    %v818 = vpack.c.b16 %v811, %v810
    %v819 = vpack.c.b16 %v813, %v812
    %v820 = vpack.c.b16 %v815, %v814
    %v821 = vpack.c.b16 %v817, %v816
    %vm826 = vcmask 523264
    %v828 = vsel %vm826, %v786, 0
    %830 = vmatprep.subr.bf16.mxu0 0
    %831 = vmatpush1.bf16.msra.mxu0 %v818
    %832 = vmatprep.subr.bf16.mxu0 0
    %833 = vmatpush1.bf16.msra.mxu0 %v819
    %834 = vmatprep.subr.bf16.mxu0 0
    %835 = vmatpush1.bf16.msra.mxu0 %v820
    %836 = vmatprep.subr.bf16.mxu0 0
    %837 = vmatpush1.bf16.msra.mxu0 %v821
    %838 = vmatprep.subr.bf16.mxu0 0
    %839 = vmatpush1.bf16.msra.mxu0 0
    %840 = vmatprep.subr.bf16.mxu0 0
    %841 = vmatpush1.bf16.msra.mxu0 0
    %842 = vmatprep.subr.bf16.mxu0 0
    %843 = vmatpush1.bf16.msra.mxu0 0
    %844 = vmatprep.subr.bf16.mxu0 0
    %845 = vmatpush1.bf16.msra.mxu0 0
    %846 = vmatprep.subr.bf16.mxu0 0
    %847 = vmatpush1.bf16.msra.mxu0 0
    %848 = vmatprep.subr.bf16.mxu0 0
    %849 = vmatpush1.bf16.msra.mxu0 0
    %850 = vmatprep.subr.bf16.mxu0 0
    %851 = vmatpush1.bf16.msra.mxu0 0
    %852 = vmatprep.subr.bf16.mxu0 0
    %853 = vmatpush1.bf16.msra.mxu0 0
    %854 = vmatprep.subr.bf16.mxu0 0
    %855 = vmatpush1.bf16.msra.mxu0 0
    %856 = vmatprep.subr.bf16.mxu0 0
    %857 = vmatpush1.bf16.msra.mxu0 0
    %858 = vmatprep.subr.bf16.mxu0 0
    %859 = vmatpush1.bf16.msra.mxu0 0
    %860 = vmatprep.subr.bf16.mxu0 0
    %861 = vmatpush1.bf16.msra.mxu0 0
    %862 = vmatprep.mubr.bf16.mxu0 0
    %863 = vmatmul.mubr.bf16.gmra.mrb[0].mxu0 %v828
    %v864 = vpop.f32.mrb[0].mxu0
    %v865 = vadd.f32 %v800, %v864
    %v866 = vpop.f32.mrb[0].mxu0
    %v867 = vpop.f32.mrb[0].mxu0
    %v868 = vpop.f32.mrb[0].mxu0
    %869 = vdwg.mxu0
    %870 = vst [vmem:[#allocation2] sm:$0xff] %v865
    // Predicated region
    $region30: #{discriminator_forward.1} parent=1 // pred_check
      _
    $region31: #{discriminator_forward.1} parent=1 // pred_check_branch
      %872 = sbr.rel (0) target = $region33
    $region32: #{discriminator_forward.1} parent=1 // pred_region
      %s874 = ssub.s32 128, 32
      %875 = vsyncadd [#allocation3], %s874
      %s876 = sshll.u32 [#allocation2], 4
      %s877 = int_to_ptr.vmem [resolvable:$true] %s876
      %882 = dma.vmem_to_hbm [thread:$0]  %s877, 32, %s7, [#allocation3], 32, 32, 2
    $region33: #{discriminator_forward.1} parent=1 // pred_fallthru
      _
    // Predicated region
    $region34: #{discriminator_forward.1} parent=1 // pred_check
      _
    $region35: #{discriminator_forward.1} parent=1 // pred_check_branch
      %884 = sbr.rel (0) target = $region37
    $region36: #{discriminator_forward.1} parent=1 // pred_region
      %885 = dma.done [#allocation3], 128
    $region37: #{discriminator_forward.1} parent=1 // pred_fallthru
      _
    %886 = vsyncpa [#allocation3], 1

</llo_original>
